<compile_context>
chip_gen: v7x
topology: tpu7x:2x2x1
jax: 0.10.0
libtpu: 0.0.40
codegen_flags: <defaults>
</compile_context>

<pallas_src>
import functools
import math

import jax
import jax.numpy as jnp
from jax import lax
from jax.experimental import pallas as pl
from jax.experimental.pallas import tpu as pltpu


def _round_up(n, m):
    return ((n + m - 1) // m) * m


# --------------------------------------------------------------------------------------
# Path 1: row-wise cosine similarity (element-wise broadcasting)
# --------------------------------------------------------------------------------------

def _cosine_rows_kernel(x_ref, y_ref, o_ref, *, temp, eps):
    # x_ref, y_ref: (TM, D) row tiles.  o_ref: (TM, 1) per-row cos-sim / temp.
    x = x_ref[...].astype(jnp.float32)      # cast in-kernel (free on the VPU)
    y = y_ref[...].astype(jnp.float32)
    dot = jnp.sum(x * y, axis=-1, keepdims=True)            # (TM, 1)
    sx = jnp.sum(x * x, axis=-1, keepdims=True)
    sy = jnp.sum(y * y, axis=-1, keepdims=True)
    denom = jnp.maximum(jnp.sqrt(sx * sy), eps)              # torch: clamp(|x||y|, eps)
    o_ref[...] = (dot / (denom * temp)).astype(o_ref.dtype)


def _similarity_rows(xb, yb, temp, eps, block_rows=512):
    n, d = xb.shape
    bytes_per = max(jnp.dtype(xb.dtype).itemsize, jnp.dtype(yb.dtype).itemsize)

    # Tile: multiple of 128 rows; 2 inputs x 2 pipeline buffers of (TM, D) must stay well
    # under the v7x scoped-VMEM budget.
    vmem_budget = 8 * 1024 * 1024
    max_tm = max(128, (vmem_budget // (4 * d * bytes_per)) // 128 * 128)
    tm = min(block_rows, max_tm, _round_up(n, 128))

    n_pad = _round_up(n, tm)
    if n_pad != n:
        # Zero rows -> denom clamps to eps, dot = 0 -> output 0; padding is numerically safe.
        xb = jnp.pad(xb, ((0, n_pad - n), (0, 0)))
        yb = jnp.pad(yb, ((0, n_pad - n), (0, 0)))

    kernel = functools.partial(_cosine_rows_kernel, temp=float(temp), eps=float(eps))
    out = pl.pallas_call(
        kernel,
        out_shape=jax.ShapeDtypeStruct((n_pad, 1), jnp.float32),
        grid_spec=pltpu.PrefetchScalarGridSpec(
            num_scalar_prefetch=0,
            grid=(n_pad // tm,),
            in_specs=[
                pl.BlockSpec((tm, d), lambda i: (i, 0)),     # x row tile
                pl.BlockSpec((tm, d), lambda i: (i, 0)),     # y row tile
            ],
            out_specs=pl.BlockSpec((tm, 1), lambda i: (i, 0)),
        ),
        compiler_params=pltpu.CompilerParams(
            dimension_semantics=("parallel",),               # independent tiles -> dual TC
        ),
    )(xb, yb)
    return out[:n, 0]                                        # (n,) float32


# --------------------------------------------------------------------------------------
# Path 2: outer-broadcast ("similarity matrix") kernel, e.g. (B,1,H) x (1,B,H) -> (B,B)
# --------------------------------------------------------------------------------------

def _cosine_matrix_kernel(x_ref, y_ref, sy_ref, o_ref, *, temp, eps):
    # x_ref: (TM, D), y_ref: (TN, D), sy_ref: (1, TN) precomputed sum(y*y) per y-row.
    x = x_ref[...].astype(jnp.float32)
    y = y_ref[...].astype(jnp.float32)
    dims = (((1,), (1,)), ((), ()))                          # 'md,nd->mn'
    s = lax.dot_general(x, y, dims,
                        precision=lax.Precision.HIGHEST,     # full f32 MXU accuracy
                        preferred_element_type=jnp.float32)  # (TM, TN)
    sx = jnp.sum(x * x, axis=-1, keepdims=True)              # (TM, 1) row stat (cheap, XLU)
    sy = sy_ref[...]                                         # (1, TN) lane-major
    denom = jnp.maximum(jnp.sqrt(sx * sy), eps)              # (TM, TN)
    o_ref[...] = (s / (denom * temp)).astype(o_ref.dtype)


def _similarity_matrix(xr, yr, temp, eps):
    m, d = xr.shape
    n = yr.shape[0]
    bytes_per = max(jnp.dtype(xr.dtype).itemsize, jnp.dtype(yr.dtype).itemsize)

    # Square-ish tiles, multiples of 128, capped by a conservative VMEM working-set budget
    # (2 input tiles + norms + output tile, double-buffered).
    budget = 12 * 1024 * 1024
    t = 256
    while t > 128 and 2 * (2 * t * d * bytes_per + t * t * 4 + t * 4) > budget:
        t //= 2
    # TODO(synk): extremely large D would need a K-tiled accumulator; typical hidden sizes fit.
    tm = min(t, _round_up(m, 128))
    tn = min(t, _round_up(n, 128))

    m_pad = _round_up(m, tm)
    n_pad = _round_up(n, tn)
    if m_pad != m:
        xr = jnp.pad(xr, ((0, m_pad - m), (0, 0)))
    if n_pad != n:
        yr = jnp.pad(yr, ((0, n_pad - n), (0, 0)))

    # Precompute y squared-norms lane-major in the wrapper: avoids an in-kernel
    # sublane->lane relayout; costs one extra cheap pass over y.
    yf = yr.astype(jnp.float32)
    sy_row = jnp.sum(yf * yf, axis=-1).reshape(1, n_pad)     # padded rows give 0 -> safe

    kernel = functools.partial(_cosine_matrix_kernel, temp=float(temp), eps=float(eps))
    out = pl.pallas_call(
        kernel,
        out_shape=jax.ShapeDtypeStruct((m_pad, n_pad), jnp.float32),
        grid_spec=pltpu.PrefetchScalarGridSpec(
            num_scalar_prefetch=0,
            grid=(m_pad // tm, n_pad // tn),
            in_specs=[
                pl.BlockSpec((tm, d), lambda i, j: (i, 0)),  # x tile: constant over j (no re-DMA)
                pl.BlockSpec((tn, d), lambda i, j: (j, 0)),  # y tile
                pl.BlockSpec((1, tn), lambda i, j: (0, j)),  # y squared-norms (lane-major)
            ],
            out_specs=pl.BlockSpec((tm, tn), lambda i, j: (i, j)),   # lane-dense output
        ),
        compiler_params=pltpu.CompilerParams(
            dimension_semantics=("parallel", "parallel"),
        ),
    )(xr, yr, sy_row)
    return out[:m, :n]                                       # (m, n) float32


# --------------------------------------------------------------------------------------
# Dispatch wrapper (torch broadcasting rules)
# --------------------------------------------------------------------------------------

def _is_outer_broadcast(x_lead, y_lead):
    """True iff out[i, j] = f(x_row_i, y_row_j): no shared varying dims, x dims before y dims."""
    r = max(len(x_lead), len(y_lead))
    xs = (1,) * (r - len(x_lead)) + tuple(x_lead)
    ys = (1,) * (r - len(y_lead)) + tuple(y_lead)
    x_vary = [i for i in range(r) if xs[i] != 1 and ys[i] == 1]
    y_vary = [i for i in range(r) if ys[i] != 1 and xs[i] == 1]
    shared = [i for i in range(r) if xs[i] != 1 and ys[i] != 1]
    if shared:
        return False
    if x_vary and y_vary and max(x_vary) > min(y_vary):
        return False
    return True


def similarity(x, y, temp, *, eps=1e-8):
    """Cosine similarity along the last dim divided by `temp` (torch broadcasting rules)."""
    x = jnp.asarray(x)
    y = jnp.asarray(y)
    d = x.shape[-1]
    if y.shape[-1] != d:
        raise ValueError("last dims of x and y must match")

    lead = jnp.broadcast_shapes(x.shape[:-1], y.shape[:-1])
    out_dtype = jnp.result_type(x.dtype, y.dtype)
    if not jnp.issubdtype(out_dtype, jnp.floating):
        out_dtype = jnp.float32

    if len(lead) >= 1 and _is_outer_broadcast(x.shape[:-1], y.shape[:-1]):
        # SimCSE-style outer broadcast: avoid materializing broadcast copies, use the MXU.
        m = math.prod(x.shape[:-1])
        n = math.prod(y.shape[:-1])
        out = _similarity_matrix(x.reshape(m, d), y.reshape(n, d), temp, eps)
        return out.reshape(lead).astype(out_dtype)

    # General / element-wise broadcast path: flatten to rows.
    xb = jnp.broadcast_to(x, lead + (d,)).reshape(-1, d)
    yb = jnp.broadcast_to(y, lead + (d,)).reshape(-1, d)
    out = _similarity_rows(xb, yb, temp, eps)
    return out.reshape(lead).astype(out_dtype)


def _reference(x, y, temp, eps=1e-8):
    dot = jnp.sum(x * y, axis=-1)
    nx = jnp.sqrt(jnp.sum(x * x, axis=-1))
    ny = jnp.sqrt(jnp.sum(y * y, axis=-1))
    return dot / jnp.maximum(nx * ny, eps) / temp


if __name__ == "__main__":
    TEMP = 0.05  # module hyper-parameter (SimCSE-style temperature)

    key = jax.random.PRNGKey(0)
    kx, ky, k3, k4, k5, k6 = jax.random.split(key, 6)

    # 1) Element-wise case: (B, S, H) vs (B, S, H) -> (B, S)   [row-wise kernel]
    B, S, H = 2, 8, 32
    x = jax.random.normal(kx, (B, S, H), jnp.float32)
    y = jax.random.normal(ky, (B, S, H), jnp.float32)
    out = jax.block_until_ready(similarity(x, y, TEMP))
    ref = _reference(x, y, TEMP)
    assert out.shape == (B, S)
    assert jnp.allclose(out, ref, atol=1e-3, rtol=1e-4), "mismatch (elementwise)"

    # 2) SimCSE broadcast case: (B, 1, H) vs (1, B, H) -> (B, B)   [matrix kernel]
    xq = x[:, 0][:, None, :]
    yk = y[:, 0][None, :, :]
    out2 = jax.block_until_ready(similarity(xq, yk, TEMP))
    ref2 = _reference(xq, yk, TEMP)
    assert out2.shape == (B, B)
    assert jnp.allclose(out2, ref2, atol=1e-3, rtol=1e-4), "mismatch (broadcast)"

    # 3) Multi-tile + padded matrix case: (M, 1, H) vs (1, N, H) -> (M, N)
    M3, N3 = 300, 200
    x3 = jax.random.normal(k3, (M3, 1, H), jnp.float32)
    y3 = jax.random.normal(k4, (1, N3, H), jnp.float32)
    out3 = jax.block_until_ready(similarity(x3, y3, TEMP))
    ref3 = _reference(x3, y3, TEMP)
    assert out3.shape == (M3, N3)
    assert jnp.allclose(out3, ref3, atol=1e-3, rtol=1e-4), "mismatch (matrix multi-tile)"

    # 4) Multi-tile + padded row-wise case: (R, H) vs (R, H) -> (R,)
    R = 600
    x4 = jax.random.normal(k5, (R, H), jnp.float32)
    y4 = jax.random.normal(k6, (R, H), jnp.float32)
    out4 = jax.block_until_ready(similarity(x4, y4, TEMP))
    ref4 = _reference(x4, y4, TEMP)
    assert out4.shape == (R,)
    assert jnp.allclose(out4, ref4, atol=1e-3, rtol=1e-4), "mismatch (rowwise multi-tile)"

    print("KERNEL_OK")
</pallas_src>

<mosaic_0001>
module attributes {stable_mosaic.version = 11 : i64} {
  func.func @_cosine_rows_kernel(%arg0: i32, %arg1: memref<128x32xf32, #tpu.memory_space<vmem>>, %arg2: memref<128x32xf32, #tpu.memory_space<vmem>>, %arg3: memref<128x1xf32, #tpu.memory_space<vmem>>) attributes {dimension_semantics = [#tpu.dimension_semantics<parallel>], iteration_bounds = array<i64: 1>, scalar_prefetch = 0 : i64, scratch_operands = 0 : i64, tpu.core_type = #tpu.core_type<tc>, window_params = [{transform_indices = @transform_0, window_bounds = array<i64: 128, 32>}, {transform_indices = @transform_1, window_bounds = array<i64: 128, 32>}, {transform_indices = @transform_2, window_bounds = array<i64: 128, 1>}]} {
    %c0 = arith.constant 0 : index
    %c0_0 = arith.constant 0 : index
    %0 = vector.load %arg1[%c0, %c0_0] : memref<128x32xf32, #tpu.memory_space<vmem>>, vector<128x32xf32>
    %c0_1 = arith.constant 0 : index
    %c0_2 = arith.constant 0 : index
    %1 = vector.load %arg2[%c0_1, %c0_2] : memref<128x32xf32, #tpu.memory_space<vmem>>, vector<128x32xf32>
    %2 = arith.mulf %0, %1 : vector<128x32xf32>
    %cst = arith.constant dense<0.000000e+00> : vector<128xf32>
    %3 = vector.multi_reduction <add>, %2, %cst [1] : vector<128x32xf32> to vector<128xf32>
    %4 = vector.shape_cast %3 : vector<128xf32> to vector<128x1xf32>
    %5 = arith.mulf %0, %0 : vector<128x32xf32>
    %cst_3 = arith.constant dense<0.000000e+00> : vector<128xf32>
    %6 = vector.multi_reduction <add>, %5, %cst_3 [1] : vector<128x32xf32> to vector<128xf32>
    %7 = vector.shape_cast %6 : vector<128xf32> to vector<128x1xf32>
    %8 = arith.mulf %1, %1 : vector<128x32xf32>
    %cst_4 = arith.constant dense<0.000000e+00> : vector<128xf32>
    %9 = vector.multi_reduction <add>, %8, %cst_4 [1] : vector<128x32xf32> to vector<128xf32>
    %10 = vector.shape_cast %9 : vector<128xf32> to vector<128x1xf32>
    %11 = arith.mulf %7, %10 : vector<128x1xf32>
    %12 = math.sqrt %11 : vector<128x1xf32>
    %cst_5 = arith.constant 9.99999993E-9 : f32
    %13 = vector.broadcast %cst_5 : f32 to vector<128x1xf32>
    %14 = arith.maximumf %12, %13 : vector<128x1xf32>
    %cst_6 = arith.constant 5.000000e-02 : f32
    %15 = vector.broadcast %cst_6 : f32 to vector<128x1xf32>
    %16 = arith.mulf %14, %15 : vector<128x1xf32>
    %17 = arith.divf %4, %16 : vector<128x1xf32>
    %c0_7 = arith.constant 0 : index
    %c0_8 = arith.constant 0 : index
    %18 = vector.load %arg3[%c0_7, %c0_8] : memref<128x1xf32, #tpu.memory_space<vmem>>, vector<128x1xf32>
    tpu.vector_store %arg3[%c0_7, %c0_8], %17 {strides = array<i32>} : memref<128x1xf32, #tpu.memory_space<vmem>>, vector<128x1xf32>,
    return
  }
  func.func @transform_0(%arg0: i32) -> (i32, i32) {
    %c0_i32 = arith.constant 0 : i32
    %c0_i32_0 = arith.constant 0 : i32
    return %arg0, %c0_i32 : i32, i32
  }
  func.func @transform_1(%arg0: i32) -> (i32, i32) {
    %c0_i32 = arith.constant 0 : i32
    %c0_i32_0 = arith.constant 0 : i32
    return %arg0, %c0_i32 : i32, i32
  }
  func.func @transform_2(%arg0: i32) -> (i32, i32) {
    %c0_i32 = arith.constant 0 : i32
    %c0_i32_0 = arith.constant 0 : i32
    return %arg0, %c0_i32 : i32, i32
  }
}

</mosaic_0001>

<llo_original>
// kernel: tpu_custom_call.1
$region0: #{tpu_custom_call.1}
  #allocation0 [shape = 'u32[]', space=smem, size = 0x4, offset = 0x4, fixed_abs, tag = 'smem constant byte address 0x4 - core index']
  #allocation1 [shape = 'u32[144,128]{1,0:T(1,128)}', space=vmem, size = 0x12000, scoped, tag = 'internal scratch']
  %s0 = inlined_call_operand.vmem [shape: f32[128,32], index: 0, kind: input, shape index: {}]
  %s1 = inlined_call_operand.vmem [shape: f32[128,32], index: 1, kind: input, shape index: {}]
  %s2 = inlined_call_operand.vmem [shape: f32[128,1], index: 2, kind: output, shape index: {}]
  %s3 = sld [smem:[#allocation0]]
  $region18: #{tpu_custom_call.1} parent=0
    _
  %s5 = ssub.s32 1, %s3
  %s6 = scalar_select 0, %s5, %s3
  // Predicated region
  $region2: #{tpu_custom_call.1} parent=0 // pred_check
    _
  $region3: #{tpu_custom_call.1} parent=0 // pred_check_branch
    %8 = sbr.rel (0) target = $region5
  $region4: #{tpu_custom_call.1} parent=0 // pred_region
    _
  $region5: #{tpu_custom_call.1} parent=0 // pred_fallthru
    _
  // Predicated region
  $region6: #{tpu_custom_call.1} parent=0 // pred_check
    _
  $region7: #{tpu_custom_call.1} parent=0 // pred_check_branch
    %10 = sbr.rel (0) target = $region9
  $region8: #{tpu_custom_call.1} parent=0 // pred_region
    _
  $region9: #{tpu_custom_call.1} parent=0 // pred_fallthru
    _
  %v11 = vld [vmem:[%s0] sm:$0xff]
  %v12 = vld [vmem:[%s0 + $0x8] sm:$0xff]
  %v13 = vld [vmem:[%s0 + $0x10] sm:$0xff]
  %v14 = vld [vmem:[%s0 + $0x18] sm:$0xff]
  %v15 = vld [vmem:[%s0 + $0x20] sm:$0xff]
  %v16 = vld [vmem:[%s0 + $0x28] sm:$0xff]
  %v17 = vld [vmem:[%s0 + $0x30] sm:$0xff]
  %v18 = vld [vmem:[%s0 + $0x38] sm:$0xff]
  %v19 = vld [vmem:[%s0 + $0x40] sm:$0xff]
  %v20 = vld [vmem:[%s0 + $0x48] sm:$0xff]
  %v21 = vld [vmem:[%s0 + $0x50] sm:$0xff]
  %v22 = vld [vmem:[%s0 + $0x58] sm:$0xff]
  %v23 = vld [vmem:[%s0 + $0x60] sm:$0xff]
  %v24 = vld [vmem:[%s0 + $0x68] sm:$0xff]
  %v25 = vld [vmem:[%s0 + $0x70] sm:$0xff]
  %v26 = vld [vmem:[%s0 + $0x78] sm:$0xff]
  %v27 = vld [vmem:[%s1] sm:$0xff]
  %v28 = vld [vmem:[%s1 + $0x8] sm:$0xff]
  %v29 = vld [vmem:[%s1 + $0x10] sm:$0xff]
  %v30 = vld [vmem:[%s1 + $0x18] sm:$0xff]
  %v31 = vld [vmem:[%s1 + $0x20] sm:$0xff]
  %v32 = vld [vmem:[%s1 + $0x28] sm:$0xff]
  %v33 = vld [vmem:[%s1 + $0x30] sm:$0xff]
  %v34 = vld [vmem:[%s1 + $0x38] sm:$0xff]
  %v35 = vld [vmem:[%s1 + $0x40] sm:$0xff]
  %v36 = vld [vmem:[%s1 + $0x48] sm:$0xff]
  %v37 = vld [vmem:[%s1 + $0x50] sm:$0xff]
  %v38 = vld [vmem:[%s1 + $0x58] sm:$0xff]
  %v39 = vld [vmem:[%s1 + $0x60] sm:$0xff]
  %v40 = vld [vmem:[%s1 + $0x68] sm:$0xff]
  %v41 = vld [vmem:[%s1 + $0x70] sm:$0xff]
  %v42 = vld [vmem:[%s1 + $0x78] sm:$0xff]
  %v43 = vmul.f32 %v11, %v27
  %v44 = vmul.f32 %v12, %v28
  %v45 = vmul.f32 %v13, %v29
  %v46 = vmul.f32 %v14, %v30
  %v47 = vmul.f32 %v15, %v31
  %v48 = vmul.f32 %v16, %v32
  %v49 = vmul.f32 %v17, %v33
  %v50 = vmul.f32 %v18, %v34
  %v51 = vmul.f32 %v19, %v35
  %v52 = vmul.f32 %v20, %v36
  %v53 = vmul.f32 %v21, %v37
  %v54 = vmul.f32 %v22, %v38
  %v55 = vmul.f32 %v23, %v39
  %v56 = vmul.f32 %v24, %v40
  %v57 = vmul.f32 %v25, %v41
  %v58 = vmul.f32 %v26, %v42
  %vm59 = vcmask 261120
  %v60 = vsel %vm59, %v43, 0.0
  %61 = vadd.xlane.f32.xlu0 %v60
  %v62 = vpop.xlane.xlu0 %61
  %v63 = vsel %vm59, %v44, 0.0
  %64 = vadd.xlane.f32.xlu0 %v63
  %v65 = vpop.xlane.xlu0 %64
  %v66 = vsel %vm59, %v45, 0.0
  %67 = vadd.xlane.f32.xlu0 %v66
  %v68 = vpop.xlane.xlu0 %67
  %v69 = vsel %vm59, %v46, 0.0
  %70 = vadd.xlane.f32.xlu0 %v69
  %v71 = vpop.xlane.xlu0 %70
  %v72 = vsel %vm59, %v47, 0.0
  %73 = vadd.xlane.f32.xlu0 %v72
  %v74 = vpop.xlane.xlu0 %73
  %v75 = vsel %vm59, %v48, 0.0
  %76 = vadd.xlane.f32.xlu0 %v75
  %v77 = vpop.xlane.xlu0 %76
  %v78 = vsel %vm59, %v49, 0.0
  %79 = vadd.xlane.f32.xlu0 %v78
  %v80 = vpop.xlane.xlu0 %79
  %v81 = vsel %vm59, %v50, 0.0
  %82 = vadd.xlane.f32.xlu0 %v81
  %v83 = vpop.xlane.xlu0 %82
  %v84 = vsel %vm59, %v51, 0.0
  %85 = vadd.xlane.f32.xlu0 %v84
  %v86 = vpop.xlane.xlu0 %85
  %v87 = vsel %vm59, %v52, 0.0
  %88 = vadd.xlane.f32.xlu0 %v87
  %v89 = vpop.xlane.xlu0 %88
  %v90 = vsel %vm59, %v53, 0.0
  %91 = vadd.xlane.f32.xlu0 %v90
  %v92 = vpop.xlane.xlu0 %91
  %v93 = vsel %vm59, %v54, 0.0
  %94 = vadd.xlane.f32.xlu0 %v93
  %v95 = vpop.xlane.xlu0 %94
  %v96 = vsel %vm59, %v55, 0.0
  %97 = vadd.xlane.f32.xlu0 %v96
  %v98 = vpop.xlane.xlu0 %97
  %v99 = vsel %vm59, %v56, 0.0
  %100 = vadd.xlane.f32.xlu0 %v99
  %v101 = vpop.xlane.xlu0 %100
  %v102 = vsel %vm59, %v57, 0.0
  %103 = vadd.xlane.f32.xlu0 %v102
  %v104 = vpop.xlane.xlu0 %103
  %v105 = vsel %vm59, %v58, 0.0
  %106 = vadd.xlane.f32.xlu0 %v105
  %v107 = vpop.xlane.xlu0 %106
  %v108 = vmul.f32 %v11, %v11
  %v109 = vmul.f32 %v12, %v12
  %v110 = vmul.f32 %v13, %v13
  %v111 = vmul.f32 %v14, %v14
  %v112 = vmul.f32 %v15, %v15
  %v113 = vmul.f32 %v16, %v16
  %v114 = vmul.f32 %v17, %v17
  %v115 = vmul.f32 %v18, %v18
  %v116 = vmul.f32 %v19, %v19
  %v117 = vmul.f32 %v20, %v20
  %v118 = vmul.f32 %v21, %v21
  %v119 = vmul.f32 %v22, %v22
  %v120 = vmul.f32 %v23, %v23
  %v121 = vmul.f32 %v24, %v24
  %v122 = vmul.f32 %v25, %v25
  %v123 = vmul.f32 %v26, %v26
  %v124 = vsel %vm59, %v108, 0.0
  %125 = vadd.xlane.f32.xlu0 %v124
  %v126 = vpop.xlane.xlu0 %125
  %v127 = vsel %vm59, %v109, 0.0
  %128 = vadd.xlane.f32.xlu0 %v127
  %v129 = vpop.xlane.xlu0 %128
  %v130 = vsel %vm59, %v110, 0.0
  %131 = vadd.xlane.f32.xlu0 %v130
  %v132 = vpop.xlane.xlu0 %131
  %v133 = vsel %vm59, %v111, 0.0
  %134 = vadd.xlane.f32.xlu0 %v133
  %v135 = vpop.xlane.xlu0 %134
  %v136 = vsel %vm59, %v112, 0.0
  %137 = vadd.xlane.f32.xlu0 %v136
  %v138 = vpop.xlane.xlu0 %137
  %v139 = vsel %vm59, %v113, 0.0
  %140 = vadd.xlane.f32.xlu0 %v139
  %v141 = vpop.xlane.xlu0 %140
  %v142 = vsel %vm59, %v114, 0.0
  %143 = vadd.xlane.f32.xlu0 %v142
  %v144 = vpop.xlane.xlu0 %143
  %v145 = vsel %vm59, %v115, 0.0
  %146 = vadd.xlane.f32.xlu0 %v145
  %v147 = vpop.xlane.xlu0 %146
  %v148 = vsel %vm59, %v116, 0.0
  %149 = vadd.xlane.f32.xlu0 %v148
  %v150 = vpop.xlane.xlu0 %149
  %v151 = vsel %vm59, %v117, 0.0
  %152 = vadd.xlane.f32.xlu0 %v151
  %v153 = vpop.xlane.xlu0 %152
  %v154 = vsel %vm59, %v118, 0.0
  %155 = vadd.xlane.f32.xlu0 %v154
  %v156 = vpop.xlane.xlu0 %155
  %v157 = vsel %vm59, %v119, 0.0
  %158 = vadd.xlane.f32.xlu0 %v157
  %v159 = vpop.xlane.xlu0 %158
  %v160 = vsel %vm59, %v120, 0.0
  %161 = vadd.xlane.f32.xlu0 %v160
  %v162 = vpop.xlane.xlu0 %161
  %v163 = vsel %vm59, %v121, 0.0
  %164 = vadd.xlane.f32.xlu0 %v163
  %v165 = vpop.xlane.xlu0 %164
  %v166 = vsel %vm59, %v122, 0.0
  %167 = vadd.xlane.f32.xlu0 %v166
  %v168 = vpop.xlane.xlu0 %167
  %v169 = vsel %vm59, %v123, 0.0
  %170 = vadd.xlane.f32.xlu0 %v169
  %v171 = vpop.xlane.xlu0 %170
  %v172 = vmul.f32 %v27, %v27
  %v173 = vmul.f32 %v28, %v28
  %v174 = vmul.f32 %v29, %v29
  %v175 = vmul.f32 %v30, %v30
  %v176 = vmul.f32 %v31, %v31
  %v177 = vmul.f32 %v32, %v32
  %v178 = vmul.f32 %v33, %v33
  %v179 = vmul.f32 %v34, %v34
  %v180 = vmul.f32 %v35, %v35
  %v181 = vmul.f32 %v36, %v36
  %v182 = vmul.f32 %v37, %v37
  %v183 = vmul.f32 %v38, %v38
  %v184 = vmul.f32 %v39, %v39
  %v185 = vmul.f32 %v40, %v40
  %v186 = vmul.f32 %v41, %v41
  %v187 = vmul.f32 %v42, %v42
  %v188 = vsel %vm59, %v172, 0.0
  %189 = vadd.xlane.f32.xlu0 %v188
  %v190 = vpop.xlane.xlu0 %189
  %v191 = vsel %vm59, %v173, 0.0
  %192 = vadd.xlane.f32.xlu0 %v191
  %v193 = vpop.xlane.xlu0 %192
  %v194 = vsel %vm59, %v174, 0.0
  %195 = vadd.xlane.f32.xlu0 %v194
  %v196 = vpop.xlane.xlu0 %195
  %v197 = vsel %vm59, %v175, 0.0
  %198 = vadd.xlane.f32.xlu0 %v197
  %v199 = vpop.xlane.xlu0 %198
  %v200 = vsel %vm59, %v176, 0.0
  %201 = vadd.xlane.f32.xlu0 %v200
  %v202 = vpop.xlane.xlu0 %201
  %v203 = vsel %vm59, %v177, 0.0
  %204 = vadd.xlane.f32.xlu0 %v203
  %v205 = vpop.xlane.xlu0 %204
  %v206 = vsel %vm59, %v178, 0.0
  %207 = vadd.xlane.f32.xlu0 %v206
  %v208 = vpop.xlane.xlu0 %207
  %v209 = vsel %vm59, %v179, 0.0
  %210 = vadd.xlane.f32.xlu0 %v209
  %v211 = vpop.xlane.xlu0 %210
  %v212 = vsel %vm59, %v180, 0.0
  %213 = vadd.xlane.f32.xlu0 %v212
  %v214 = vpop.xlane.xlu0 %213
  %v215 = vsel %vm59, %v181, 0.0
  %216 = vadd.xlane.f32.xlu0 %v215
  %v217 = vpop.xlane.xlu0 %216
  %v218 = vsel %vm59, %v182, 0.0
  %219 = vadd.xlane.f32.xlu0 %v218
  %v220 = vpop.xlane.xlu0 %219
  %v221 = vsel %vm59, %v183, 0.0
  %222 = vadd.xlane.f32.xlu0 %v221
  %v223 = vpop.xlane.xlu0 %222
  %v224 = vsel %vm59, %v184, 0.0
  %225 = vadd.xlane.f32.xlu0 %v224
  %v226 = vpop.xlane.xlu0 %225
  %v227 = vsel %vm59, %v185, 0.0
  %228 = vadd.xlane.f32.xlu0 %v227
  %v229 = vpop.xlane.xlu0 %228
  %v230 = vsel %vm59, %v186, 0.0
  %231 = vadd.xlane.f32.xlu0 %v230
  %v232 = vpop.xlane.xlu0 %231
  %v233 = vsel %vm59, %v187, 0.0
  %234 = vadd.xlane.f32.xlu0 %v233
  %v235 = vpop.xlane.xlu0 %234
  %v236 = vmul.f32 %v126, %v190
  %v237 = vmul.f32 %v129, %v193
  %v238 = vmul.f32 %v132, %v196
  %v239 = vmul.f32 %v135, %v199
  %v240 = vmul.f32 %v138, %v202
  %v241 = vmul.f32 %v141, %v205
  %v242 = vmul.f32 %v144, %v208
  %v243 = vmul.f32 %v147, %v211
  %v244 = vmul.f32 %v150, %v214
  %v245 = vmul.f32 %v153, %v217
  %v246 = vmul.f32 %v156, %v220
  %v247 = vmul.f32 %v159, %v223
  %v248 = vmul.f32 %v162, %v226
  %v249 = vmul.f32 %v165, %v229
  %v250 = vmul.f32 %v168, %v232
  %v251 = vmul.f32 %v171, %v235
  %v252 = vrsqrt.pop %v236
  %v253 = vmul.f32 %v236, %v252
  %vm254 = vcmp.eq.f32.partialorder %v236, inf
  %v255 = vsel %vm254, %v236, %v253
  %vm256 = vcmp.eq.f32.partialorder %v236, 0.0
  %v257 = vand.u32 %v236, 2147483648
  %v258 = vsel %vm256, %v257, %v255
  %v259 = vrsqrt.pop %v237
  %v260 = vmul.f32 %v237, %v259
  %vm261 = vcmp.eq.f32.partialorder %v237, inf
  %v262 = vsel %vm261, %v237, %v260
  %vm263 = vcmp.eq.f32.partialorder %v237, 0.0
  %v264 = vand.u32 %v237, 2147483648
  %v265 = vsel %vm263, %v264, %v262
  %v266 = vrsqrt.pop %v238
  %v267 = vmul.f32 %v238, %v266
  %vm268 = vcmp.eq.f32.partialorder %v238, inf
  %v269 = vsel %vm268, %v238, %v267
  %vm270 = vcmp.eq.f32.partialorder %v238, 0.0
  %v271 = vand.u32 %v238, 2147483648
  %v272 = vsel %vm270, %v271, %v269
  %v273 = vrsqrt.pop %v239
  %v274 = vmul.f32 %v239, %v273
  %vm275 = vcmp.eq.f32.partialorder %v239, inf
  %v276 = vsel %vm275, %v239, %v274
  %vm277 = vcmp.eq.f32.partialorder %v239, 0.0
  %v278 = vand.u32 %v239, 2147483648
  %v279 = vsel %vm277, %v278, %v276
  %v280 = vrsqrt.pop %v240
  %v281 = vmul.f32 %v240, %v280
  %vm282 = vcmp.eq.f32.partialorder %v240, inf
  %v283 = vsel %vm282, %v240, %v281
  %vm284 = vcmp.eq.f32.partialorder %v240, 0.0
  %v285 = vand.u32 %v240, 2147483648
  %v286 = vsel %vm284, %v285, %v283
  %v287 = vrsqrt.pop %v241
  %v288 = vmul.f32 %v241, %v287
  %vm289 = vcmp.eq.f32.partialorder %v241, inf
  %v290 = vsel %vm289, %v241, %v288
  %vm291 = vcmp.eq.f32.partialorder %v241, 0.0
  %v292 = vand.u32 %v241, 2147483648
  %v293 = vsel %vm291, %v292, %v290
  %v294 = vrsqrt.pop %v242
  %v295 = vmul.f32 %v242, %v294
  %vm296 = vcmp.eq.f32.partialorder %v242, inf
  %v297 = vsel %vm296, %v242, %v295
  %vm298 = vcmp.eq.f32.partialorder %v242, 0.0
  %v299 = vand.u32 %v242, 2147483648
  %v300 = vsel %vm298, %v299, %v297
  %v301 = vrsqrt.pop %v243
  %v302 = vmul.f32 %v243, %v301
  %vm303 = vcmp.eq.f32.partialorder %v243, inf
  %v304 = vsel %vm303, %v243, %v302
  %vm305 = vcmp.eq.f32.partialorder %v243, 0.0
  %v306 = vand.u32 %v243, 2147483648
  %v307 = vsel %vm305, %v306, %v304
  %v308 = vrsqrt.pop %v244
  %v309 = vmul.f32 %v244, %v308
  %vm310 = vcmp.eq.f32.partialorder %v244, inf
  %v311 = vsel %vm310, %v244, %v309
  %vm312 = vcmp.eq.f32.partialorder %v244, 0.0
  %v313 = vand.u32 %v244, 2147483648
  %v314 = vsel %vm312, %v313, %v311
  %v315 = vrsqrt.pop %v245
  %v316 = vmul.f32 %v245, %v315
  %vm317 = vcmp.eq.f32.partialorder %v245, inf
  %v318 = vsel %vm317, %v245, %v316
  %vm319 = vcmp.eq.f32.partialorder %v245, 0.0
  %v320 = vand.u32 %v245, 2147483648
  %v321 = vsel %vm319, %v320, %v318
  %v322 = vrsqrt.pop %v246
  %v323 = vmul.f32 %v246, %v322
  %vm324 = vcmp.eq.f32.partialorder %v246, inf
  %v325 = vsel %vm324, %v246, %v323
  %vm326 = vcmp.eq.f32.partialorder %v246, 0.0
  %v327 = vand.u32 %v246, 2147483648
  %v328 = vsel %vm326, %v327, %v325
  %v329 = vrsqrt.pop %v247
  %v330 = vmul.f32 %v247, %v329
  %vm331 = vcmp.eq.f32.partialorder %v247, inf
  %v332 = vsel %vm331, %v247, %v330
  %vm333 = vcmp.eq.f32.partialorder %v247, 0.0
  %v334 = vand.u32 %v247, 2147483648
  %v335 = vsel %vm333, %v334, %v332
  %v336 = vrsqrt.pop %v248
  %v337 = vmul.f32 %v248, %v336
  %vm338 = vcmp.eq.f32.partialorder %v248, inf
  %v339 = vsel %vm338, %v248, %v337
  %vm340 = vcmp.eq.f32.partialorder %v248, 0.0
  %v341 = vand.u32 %v248, 2147483648
  %v342 = vsel %vm340, %v341, %v339
  %v343 = vrsqrt.pop %v249
  %v344 = vmul.f32 %v249, %v343
  %vm345 = vcmp.eq.f32.partialorder %v249, inf
  %v346 = vsel %vm345, %v249, %v344
  %vm347 = vcmp.eq.f32.partialorder %v249, 0.0
  %v348 = vand.u32 %v249, 2147483648
  %v349 = vsel %vm347, %v348, %v346
  %v350 = vrsqrt.pop %v250
  %v351 = vmul.f32 %v250, %v350
  %vm352 = vcmp.eq.f32.partialorder %v250, inf
  %v353 = vsel %vm352, %v250, %v351
  %vm354 = vcmp.eq.f32.partialorder %v250, 0.0
  %v355 = vand.u32 %v250, 2147483648
  %v356 = vsel %vm354, %v355, %v353
  %v357 = vrsqrt.pop %v251
  %v358 = vmul.f32 %v251, %v357
  %vm359 = vcmp.eq.f32.partialorder %v251, inf
  %v360 = vsel %vm359, %v251, %v358
  %vm361 = vcmp.eq.f32.partialorder %v251, 0.0
  %v362 = vand.u32 %v251, 2147483648
  %v363 = vsel %vm361, %v362, %v360
  %v364 = vmax.f32 %v258, 1e-08
  %v365 = vmax.f32 %v265, 1e-08
  %v366 = vmax.f32 %v272, 1e-08
  %v367 = vmax.f32 %v279, 1e-08
  %v368 = vmax.f32 %v286, 1e-08
  %v369 = vmax.f32 %v293, 1e-08
  %v370 = vmax.f32 %v300, 1e-08
  %v371 = vmax.f32 %v307, 1e-08
  %v372 = vmax.f32 %v314, 1e-08
  %v373 = vmax.f32 %v321, 1e-08
  %v374 = vmax.f32 %v328, 1e-08
  %v375 = vmax.f32 %v335, 1e-08
  %v376 = vmax.f32 %v342, 1e-08
  %v377 = vmax.f32 %v349, 1e-08
  %v378 = vmax.f32 %v356, 1e-08
  %v379 = vmax.f32 %v363, 1e-08
  %v380 = vmul.f32 %v364, 0.05
  %v381 = vmul.f32 %v365, 0.05
  %v382 = vmul.f32 %v366, 0.05
  %v383 = vmul.f32 %v367, 0.05
  %v384 = vmul.f32 %v368, 0.05
  %v385 = vmul.f32 %v369, 0.05
  %v386 = vmul.f32 %v370, 0.05
  %v387 = vmul.f32 %v371, 0.05
  %v388 = vmul.f32 %v372, 0.05
  %v389 = vmul.f32 %v373, 0.05
  %v390 = vmul.f32 %v374, 0.05
  %v391 = vmul.f32 %v375, 0.05
  %v392 = vmul.f32 %v376, 0.05
  %v393 = vmul.f32 %v377, 0.05
  %v394 = vmul.f32 %v378, 0.05
  %v395 = vmul.f32 %v379, 0.05
  %v396 = vrcp.pop %v380
  %v397 = vmul.f32 %v62, %v396
  %v398 = vrcp.pop %v381
  %v399 = vmul.f32 %v65, %v398
  %v400 = vrcp.pop %v382
  %v401 = vmul.f32 %v68, %v400
  %v402 = vrcp.pop %v383
  %v403 = vmul.f32 %v71, %v402
  %v404 = vrcp.pop %v384
  %v405 = vmul.f32 %v74, %v404
  %v406 = vrcp.pop %v385
  %v407 = vmul.f32 %v77, %v406
  %v408 = vrcp.pop %v386
  %v409 = vmul.f32 %v80, %v408
  %v410 = vrcp.pop %v387
  %v411 = vmul.f32 %v83, %v410
  %v412 = vrcp.pop %v388
  %v413 = vmul.f32 %v86, %v412
  %v414 = vrcp.pop %v389
  %v415 = vmul.f32 %v89, %v414
  %v416 = vrcp.pop %v390
  %v417 = vmul.f32 %v92, %v416
  %v418 = vrcp.pop %v391
  %v419 = vmul.f32 %v95, %v418
  %v420 = vrcp.pop %v392
  %v421 = vmul.f32 %v98, %v420
  %v422 = vrcp.pop %v393
  %v423 = vmul.f32 %v101, %v422
  %v424 = vrcp.pop %v394
  %v425 = vmul.f32 %v104, %v424
  %v426 = vrcp.pop %v395
  %v427 = vmul.f32 %v107, %v426
  %vm428 = vcmask 7168
  %429 = vst.msk [vmem:[%s2] sm:$0xff] %vm428, %v397
  %430 = vst.msk [vmem:[%s2 + $0x8] sm:$0xff] %vm428, %v399
  %431 = vst.msk [vmem:[%s2 + $0x10] sm:$0xff] %vm428, %v401
  %432 = vst.msk [vmem:[%s2 + $0x18] sm:$0xff] %vm428, %v403
  %433 = vst.msk [vmem:[%s2 + $0x20] sm:$0xff] %vm428, %v405
  %434 = vst.msk [vmem:[%s2 + $0x28] sm:$0xff] %vm428, %v407
  %435 = vst.msk [vmem:[%s2 + $0x30] sm:$0xff] %vm428, %v409
  %436 = vst.msk [vmem:[%s2 + $0x38] sm:$0xff] %vm428, %v411
  %437 = vst.msk [vmem:[%s2 + $0x40] sm:$0xff] %vm428, %v413
  %438 = vst.msk [vmem:[%s2 + $0x48] sm:$0xff] %vm428, %v415
  %439 = vst.msk [vmem:[%s2 + $0x50] sm:$0xff] %vm428, %v417
  %440 = vst.msk [vmem:[%s2 + $0x58] sm:$0xff] %vm428, %v419
  %441 = vst.msk [vmem:[%s2 + $0x60] sm:$0xff] %vm428, %v421
  %442 = vst.msk [vmem:[%s2 + $0x68] sm:$0xff] %vm428, %v423
  %443 = vst.msk [vmem:[%s2 + $0x70] sm:$0xff] %vm428, %v425
  %444 = vst.msk [vmem:[%s2 + $0x78] sm:$0xff] %vm428, %v427
  // Predicated region
  $region10: #{tpu_custom_call.1} parent=0 // pred_check
    _
  $region11: #{tpu_custom_call.1} parent=0 // pred_check_branch
    %446 = sbr.rel (0) target = $region13
  $region12: #{tpu_custom_call.1} parent=0 // pred_region
    _
  $region13: #{tpu_custom_call.1} parent=0 // pred_fallthru
    _
  // Predicated region
  $region14: #{tpu_custom_call.1} parent=0 // pred_check
    _
  $region15: #{tpu_custom_call.1} parent=0 // pred_check_branch
    %448 = sbr.rel (0) target = $region17
  $region16: #{tpu_custom_call.1} parent=0 // pred_region
    _
  $region17: #{tpu_custom_call.1} parent=0 // pred_fallthru
    _

</llo_original>
